<compile_context>
chip_gen: v7x
topology: tpu7x:2x2x1
jax: 0.10.0
libtpu: 0.0.40
codegen_flags: <defaults>
</compile_context>

<pallas_src>
import jax
import jax.numpy as jnp
from jax import lax
from jax.experimental import pallas as pl
from jax.experimental.pallas import tpu as pltpu

KERNEL_SIZE = 3
DILATION = 2


def _make_conv1d_kernel(chunk, trips):
    """Builds the kernel body with static row-chunk size / trip count baked in."""

    def kernel(w_ref, x_ref, o_ref):
        # w_ref: SMEM (3,)  f32
        # x_ref: VMEM (tm, L)     f32
        # o_ref: VMEM (tm, L_out) f32
        l_out = o_ref.shape[-1]
        w0 = w_ref[0]
        w1 = w_ref[1]
        w2 = w_ref[2]

        def compute_rows(row_slice):
            x = x_ref[row_slice, :]                      # single load of the row chunk
            y = (w0 * x[:, 0:l_out]
                 + w1 * x[:, DILATION:DILATION + l_out]
                 + w2 * x[:, 2 * DILATION:2 * DILATION + l_out])
            o_ref[row_slice, :] = y.astype(o_ref.dtype)

        if trips == 1:
            compute_rows(slice(None))
        else:
            def step(i, carry):
                r = pl.multiple_of(i * chunk, chunk)
                compute_rows(pl.ds(r, chunk))
                return carry

            lax.fori_loop(0, trips, step, 0, unroll=False)

    return kernel


def conv1d_dilated(x, weight, *, target_tile_bytes=4 << 20, row_chunk=256):
    """x: (N, 1, L) f32, weight: (1, 1, 3) f32 -> (N, 1, L_out) f32 (valid, dilation=2)."""
    n, c_in, length = x.shape
    assert c_in == 1 and weight.shape == (1, 1, KERNEL_SIZE)
    l_out = length - DILATION * (KERNEL_SIZE - 1)
    assert l_out > 0, "input length must exceed dilated receptive field"

    x2d = x.reshape(n, length).astype(jnp.float32)        # metadata-only reshape
    w1d = weight.reshape(KERNEL_SIZE).astype(jnp.float32)

    # --- row-tile size from a byte budget (multiple of 8 sublanes) ---
    bytes_per_row = length * 4
    rows_budget = max(8, (target_tile_bytes // bytes_per_row) // 8 * 8)
    tm = n if rows_budget >= n else rows_budget
    if tm > row_chunk:
        chunk = row_chunk
        tm = (tm // chunk) * chunk          # tm a multiple of the inner chunk
    else:
        chunk = tm                          # single inner chunk (tm == full dim or /8)
    trips = tm // chunk
    grid = pl.cdiv(n, tm)                   # ragged last block handled by Pallas

    cost = pl.CostEstimate(
        flops=5 * n * l_out,                # 3 mul + 2 add per output element
        transcendentals=0,
        bytes_accessed=4 * n * (length + l_out),
    )

    out2d = pl.pallas_call(
        _make_conv1d_kernel(chunk, trips),
        out_shape=jax.ShapeDtypeStruct((n, l_out), jnp.float32),
        grid=(grid,),
        in_specs=[
            pl.BlockSpec(memory_space=pltpu.MemorySpace.SMEM),   # (3,) weights
            pl.BlockSpec((tm, length), lambda i: (i, 0)),        # row tile of x (full L)
        ],
        out_specs=pl.BlockSpec((tm, l_out), lambda i: (i, 0)),   # direct (N, L_out) output
        compiler_params=pltpu.CompilerParams(
            dimension_semantics=("parallel",),
            vmem_limit_bytes=64 << 20,
        ),
        cost_estimate=cost,
    )(w1d, x2d)

    return out2d.reshape(n, 1, l_out)


if __name__ == "__main__":
    key = jax.random.PRNGKey(0)
    N, C, L = 2, 1, 16
    x = jax.random.normal(key, (N, C, L), dtype=jnp.float32)

    # Deterministic parameter init per the module: weights = ones * 2.0, no bias.
    weight = jnp.full((1, 1, KERNEL_SIZE), 2.0, dtype=jnp.float32)

    out = conv1d_dilated(x, weight)
    out = jax.block_until_ready(out)

    # Reference check against lax dilated conv (same semantics as torch Conv1d).
    ref = jax.lax.conv_general_dilated(
        x, weight,
        window_strides=(1,),
        padding="VALID",
        rhs_dilation=(DILATION,),
        dimension_numbers=("NCH", "OIH", "NCH"),
    )
    assert out.shape == (N, 1, L - DILATION * (KERNEL_SIZE - 1))
    assert jnp.allclose(out, ref, atol=1e-5, rtol=1e-5)

    print("KERNEL_OK")
</pallas_src>

<mosaic_0001>
module attributes {stable_mosaic.version = 11 : i64} {
  func.func @kernel(%arg0: i32, %arg1: memref<3xf32, #tpu.memory_space<smem>>, %arg2: memref<2x16xf32, #tpu.memory_space<vmem>>, %arg3: memref<2x12xf32, #tpu.memory_space<vmem>>) attributes {dimension_semantics = [#tpu.dimension_semantics<parallel>], iteration_bounds = array<i64: 1>, scalar_prefetch = 0 : i64, scratch_operands = 0 : i64, tpu.core_type = #tpu.core_type<tc>, window_params = [{transform_indices = @transform_0, window_bounds = array<i64: 3>}, {transform_indices = @transform_1, window_bounds = array<i64: 2, 16>}, {transform_indices = @transform_2, window_bounds = array<i64: 2, 12>}]} {
    %c0 = arith.constant 0 : index
    %0 = memref.load %arg1[%c0] : memref<3xf32, #tpu.memory_space<smem>>
    %c1 = arith.constant 1 : index
    %1 = memref.load %arg1[%c1] : memref<3xf32, #tpu.memory_space<smem>>
    %c2 = arith.constant 2 : index
    %2 = memref.load %arg1[%c2] : memref<3xf32, #tpu.memory_space<smem>>
    %c0_0 = arith.constant 0 : index
    %c0_1 = arith.constant 0 : index
    %3 = vector.load %arg2[%c0_0, %c0_1] : memref<2x16xf32, #tpu.memory_space<vmem>>, vector<2x16xf32>
    %4 = vector.extract_strided_slice %3 {offsets = [0, 0], sizes = [2, 12], strides = [1, 1]} : vector<2x16xf32> to vector<2x12xf32>
    %5 = vector.broadcast %0 : f32 to vector<2x12xf32>
    %6 = arith.mulf %5, %4 : vector<2x12xf32>
    %7 = vector.extract_strided_slice %3 {offsets = [0, 2], sizes = [2, 12], strides = [1, 1]} : vector<2x16xf32> to vector<2x12xf32>
    %8 = vector.broadcast %1 : f32 to vector<2x12xf32>
    %9 = arith.mulf %8, %7 : vector<2x12xf32>
    %10 = arith.addf %6, %9 : vector<2x12xf32>
    %11 = vector.extract_strided_slice %3 {offsets = [0, 4], sizes = [2, 12], strides = [1, 1]} : vector<2x16xf32> to vector<2x12xf32>
    %12 = vector.broadcast %2 : f32 to vector<2x12xf32>
    %13 = arith.mulf %12, %11 : vector<2x12xf32>
    %14 = arith.addf %10, %13 : vector<2x12xf32>
    %c0_2 = arith.constant 0 : index
    %c0_3 = arith.constant 0 : index
    %15 = vector.load %arg3[%c0_2, %c0_3] : memref<2x12xf32, #tpu.memory_space<vmem>>, vector<2x12xf32>
    tpu.vector_store %arg3[%c0_2, %c0_3], %14 {strides = array<i32>} : memref<2x12xf32, #tpu.memory_space<vmem>>, vector<2x12xf32>,
    return
  }
  func.func @transform_0(%arg0: i32) -> i32 {
    %c0_i32 = arith.constant 0 : i32
    %c0_i32_0 = arith.constant 0 : i32
    return %c0_i32 : i32
  }
  func.func @transform_1(%arg0: i32) -> (i32, i32) {
    %c0_i32 = arith.constant 0 : i32
    %c0_i32_0 = arith.constant 0 : i32
    return %arg0, %c0_i32 : i32, i32
  }
  func.func @transform_2(%arg0: i32) -> (i32, i32) {
    %c0_i32 = arith.constant 0 : i32
    %c0_i32_0 = arith.constant 0 : i32
    return %arg0, %c0_i32 : i32, i32
  }
}

</mosaic_0001>

<llo_original>
// kernel: tpu_custom_call.1
$region0: #{tpu_custom_call.1}
  #allocation0 [shape = 'u32[]', space=smem, size = 0x4, offset = 0x4, fixed_abs, tag = 'smem constant byte address 0x4 - core index']
  #allocation1 [shape = 'u32[144,128]{1,0:T(1,128)}', space=vmem, size = 0x12000, scoped, tag = 'internal scratch']
  %s0 = inlined_call_operand.hbm [shape: f32[3], index: 0, kind: input, shape index: {}]
  %s1 = inlined_call_operand.hbm [shape: f32[2,16], index: 1, kind: input, shape index: {}]
  %s2 = inlined_call_operand.hbm [shape: f32[2,12], index: 2, kind: output, shape index: {}]
  %s3 = sld [smem:[#allocation0]]
  $region26: #{tpu_custom_call.1} parent=0
    _
  %s5 = ssub.s32 1, %s3
  %s6 = scalar_select 0, %s5, %s3
  $region1: #{tpu_custom_call.1} parent=0
    #allocation2 [shape = 'u8[512]{0}', space=smem, size = 0x200, scoped, tag = 'input window, operand 0, single buffered']
    #allocation3 [shape = 's32[1]{0}', space=sflag, size = 0x4, scoped, tag = 'scoped memory for tpu_custom_call.1']
    #allocation4 [shape = 's32[1]{0}', space=sflag, size = 0x4, scoped, tag = 'scoped memory for tpu_custom_call.1']
    #allocation5 [shape = 's32[1]{0}', space=sflag, size = 0x4, scoped, tag = 'scoped memory for tpu_custom_call.1']
    #allocation6 [shape = 'u8[1024]{0}', space=vmem, size = 0x400, scoped, tag = 'input window, operand 1, single buffered']
    #allocation7 [shape = 'u8[1024]{0}', space=vmem, size = 0x400, scoped, tag = 'output window, operand 0, single buffered']
    %7 = vsyncpa [#allocation5], 0
    %8 = vsyncpa [#allocation3], 0
    %9 = vsyncpa [#allocation4], 0
    // Predicated region
    $region2: #{tpu_custom_call.1} parent=1 // pred_check
      _
    $region3: #{tpu_custom_call.1} parent=1 // pred_check_branch
      %11 = sbr.rel (0) target = $region5
    $region4: #{tpu_custom_call.1} parent=1 // pred_region
      %s13 = ssub.s32 16, 16
      %14 = vsyncadd [#allocation5], %s13
      %17 = dma.hbm_to_smem %s0, 16, [#allocation2], [#allocation5]
    $region5: #{tpu_custom_call.1} parent=1 // pred_fallthru
      _
    // Predicated region
    $region6: #{tpu_custom_call.1} parent=1 // pred_check
      _
    $region7: #{tpu_custom_call.1} parent=1 // pred_check_branch
      %19 = sbr.rel (0) target = $region9
    $region8: #{tpu_custom_call.1} parent=1 // pred_region
      %s21 = ssub.s32 32, 32
      %22 = vsyncadd [#allocation3], %s21
      %s24 = sshll.u32 [#allocation6], 4
      %s25 = int_to_ptr.vmem [resolvable:$true] %s24
      %27 = dma.hbm_to_vmem [thread:$0]  %s1, 32, %s25, [#allocation3]
    $region9: #{tpu_custom_call.1} parent=1 // pred_fallthru
      _
    // Predicated region
    $region10: #{tpu_custom_call.1} parent=1 // pred_check
      _
    $region11: #{tpu_custom_call.1} parent=1 // pred_check_branch
      %29 = sbr.rel (0) target = $region13
    $region12: #{tpu_custom_call.1} parent=1 // pred_region
      %30 = dma.done [#allocation5], 16
    $region13: #{tpu_custom_call.1} parent=1 // pred_fallthru
      _
    // Predicated region
    $region14: #{tpu_custom_call.1} parent=1 // pred_check
      _
    $region15: #{tpu_custom_call.1} parent=1 // pred_check_branch
      %32 = sbr.rel (0) target = $region17
    $region16: #{tpu_custom_call.1} parent=1 // pred_region
      %33 = dma.done [#allocation3], 32
    $region17: #{tpu_custom_call.1} parent=1 // pred_fallthru
      _
    %34 = sfence
    %s35 = sld [smem:[#allocation2]]
    %s36 = sld [smem:[#allocation2 + $0x1]]
    %s37 = sld [smem:[#allocation2 + $0x2]]
    %v38 = vld [vmem:[#allocation6] sm:$0x3]
    %v39 = vstv %s35
    %v40 = vmul.f32 %v39, %v38
    %v41 = vstv %s36
    %v42 = vmul.f32 %v41, %v38
    %44 = vrot.lane.b32.xlu0 %v42, 126
    %v45 = vpop.permute.xlu0 %44
    %v47 = vadd.f32 %v40, %v45
    %v48 = vstv %s37
    %v49 = vmul.f32 %v48, %v38
    %51 = vrot.lane.b32.xlu0 %v49, 124
    %v52 = vpop.permute.xlu0 %51
    %v54 = vadd.f32 %v47, %v52
    %vm55 = vcmask 91136
    %56 = vst.msk [vmem:[#allocation7] sm:$0x3] %vm55, %v54
    // Predicated region
    $region18: #{tpu_custom_call.1} parent=1 // pred_check
      _
    $region19: #{tpu_custom_call.1} parent=1 // pred_check_branch
      %58 = sbr.rel (0) target = $region21
    $region20: #{tpu_custom_call.1} parent=1 // pred_region
      %s60 = ssub.s32 32, 32
      %61 = vsyncadd [#allocation4], %s60
      %s63 = sshll.u32 [#allocation7], 4
      %s64 = int_to_ptr.vmem [resolvable:$true] %s63
      %66 = dma.vmem_to_hbm [thread:$0]  %s64, 32, %s2, [#allocation4]
    $region21: #{tpu_custom_call.1} parent=1 // pred_fallthru
      _
    // Predicated region
    $region22: #{tpu_custom_call.1} parent=1 // pred_check
      _
    $region23: #{tpu_custom_call.1} parent=1 // pred_check_branch
      %68 = sbr.rel (0) target = $region25
    $region24: #{tpu_custom_call.1} parent=1 // pred_region
      %69 = dma.done [#allocation4], 32
    $region25: #{tpu_custom_call.1} parent=1 // pred_fallthru
      _
    %70 = vsyncpa [#allocation3], 1
    %71 = vsyncpa [#allocation4], 1
    %72 = vsyncpa [#allocation5], 1

</llo_original>
